<compile_context>
chip_gen: v6e
topology: v6e:2x2x1
jax: 0.10.0
libtpu: 0.0.40
codegen_flags: <defaults>
</compile_context>

<pallas_src>
import jax
import jax.numpy as jnp
import numpy as np
from jax.experimental import pallas as pl
from jax.experimental.pallas import tpu as pltpu


OUT_LANES = 128  # lane-dense output slab width


# ----------------------------------------------------------------------------
# Pallas kernel: fused streaming head
# ----------------------------------------------------------------------------
def _make_head_kernel(seq_len: int, seq_tile: int, n_seq_blocks: int,
                      masked: bool):
    inv_seq = 1.0 / float(seq_len)
    last_block = n_seq_blocks - 1
    last_off = (seq_len - 1) - last_block * seq_tile   # static in-block offset
    valid_last = seq_len - last_block * seq_tile       # valid rows, last block

    def kernel(x_ref, pooler_ref, w_ref, bias_ref, out_ref,
               sum_acc, max_acc, first_tok):
        s = pl.program_id(1)

        x = x_ref[...]                                  # (Bt, St, H) raw dtype

        @pl.when(s == 0)
        def _init():
            sum_acc[...] = jnp.zeros_like(sum_acc)
            max_acc[...] = jnp.full_like(max_acc, -jnp.inf)
            # cast only the (Bt, H) first-token slice
            first_tok[...] = x[:, 0, :].astype(jnp.float32)

        if masked:
            # Ragged last seq block: ignore rows >= valid_last.
            row = jax.lax.broadcasted_iota(jnp.int32, (1, seq_tile, 1), 1)
            nvalid = jnp.where(s == last_block, valid_last, seq_tile)
            keep = row < nvalid
            x_sum = jnp.where(keep, x, jnp.zeros_like(x))
            x_max = jnp.where(keep, x, jnp.array(-jnp.inf, x.dtype))
        else:
            x_sum = x
            x_max = x

        # Streaming reductions over the sequence (sublane) axis: fused f32
        # accumulation for the sum, raw-dtype max then a (Bt, H) cast.  No
        # full-tile f32 copy is materialized.
        sum_acc[...] = sum_acc[...] + jnp.sum(x_sum, axis=1, dtype=jnp.float32)
        max_acc[...] = jnp.maximum(max_acc[...],
                                   jnp.max(x_max, axis=1).astype(jnp.float32))

        @pl.when(s == last_block)
        def _finalize():
            last_tok = x[:, last_off, :].astype(jnp.float32)     # (Bt, H)
            avg = sum_acc[...] * inv_seq                         # (Bt, H)
            w = w_ref[...].astype(jnp.float32)                   # (5, H)
            pooled = pooler_ref[...][:, 0, :].astype(jnp.float32)  # (Bt, H)
            # concat([avg, max, last, first, pooled]) @ w_flat == sum of
            # per-chunk elementwise products; stays on VPU/XLU, off the MXU.
            contrib = (w[0:1, :] * avg
                       + w[1:2, :] * max_acc[...]
                       + w[2:3, :] * last_tok
                       + w[3:4, :] * first_tok[...]
                       + w[4:5, :] * pooled)
            logit = jnp.sum(contrib, axis=-1, keepdims=True) + bias_ref[0]
            prob = jax.nn.sigmoid(logit)                         # (Bt, 1)
            # Lane-dense store: broadcast each per-row scalar across 128 lanes.
            out_ref[...] = jnp.broadcast_to(
                prob[:, :, None], out_ref.shape).astype(out_ref.dtype)

    return kernel


# ----------------------------------------------------------------------------
# Tiling helpers
# ----------------------------------------------------------------------------
def _tpu_vmem_capacity_bytes() -> int:
    try:
        return int(pltpu.get_tpu_info().vmem_capacity_bytes)
    except Exception:
        return 64 * 1024 * 1024        # conservative (v7x-sized) default


def _pick_batch_tile(batch: int, max_tile: int) -> int:
    """Largest divisor of B <= max_tile, preferring >= 2 batch blocks so the
    'parallel' grid axis can shard across v7x's two TensorCores.  A divisor
    means we never need to pad the full [B,S,H] tensor."""
    divs = [d for d in range(1, batch + 1) if batch % d == 0 and d <= max_tile]
    if not divs:
        return batch
    multi = [d for d in divs if batch // d >= 2]
    return max(multi) if multi else max(divs)


def _pick_seq_tile(seq_len: int, max_tile: int):
    """Returns (tile, needs_mask).  Prefers a multiple-of-8 divisor of S; if
    none exists below max_tile, uses a near-max multiple-of-8 tile with a
    masked ragged last block (never the full-S fallback, which can blow past
    VMEM for awkward S)."""
    if seq_len <= max_tile:
        return seq_len, False
    start = max(8, max_tile - (max_tile % 8))
    for st in range(start, 7, -8):
        if seq_len % st == 0:
            return st, False
    return start, True


# ----------------------------------------------------------------------------
# Wrapper
# ----------------------------------------------------------------------------
def net_head_pallas(q_embedding, pooler, fc_w, fc_b, *,
                    seq_tile: int = 2048, batch_tile: int = 8,
                    interpret: bool = False):
    """Fused Net head: avg/max pool over S, first/last token, 5H->1 linear,
    sigmoid.

    q_embedding: [B, S, H] (bf16 or f32)   pooler: [B, H]
    fc_w: [5*H]   fc_b: scalar
    returns: [B, 1] float32 probabilities
    """
    B, S, H = q_embedding.shape
    assert pooler.shape == (B, H)
    assert fc_w.shape == (5 * H,)

    # ---- per-generation VMEM budget (v5e/v6e 128 MiB -> ~96; v7x 64 -> 48)
    vmem_budget = min(_tpu_vmem_capacity_bytes() * 3 // 4, 100 * 1024 * 1024)

    # ---- batch tiling: Bt always divides B (no full-tensor jnp.pad)
    Bt = _pick_batch_tile(B, batch_tile)
    n_b = B // Bt

    # ---- sequence tiling bounded by the VMEM budget (double-buffered q tile
    # capped at ~half the budget); ragged last block handled by in-kernel mask
    itemsize = q_embedding.dtype.itemsize
    max_st = (vmem_budget // 2) // max(1, 2 * Bt * H * itemsize)
    max_st = max(8, (max_st // 8) * 8)
    St, masked = _pick_seq_tile(S, min(seq_tile, max_st))
    n_s = -(-S // St)

    w5 = fc_w.reshape(5, H).astype(jnp.float32)
    bias = jnp.asarray(fc_b, jnp.float32).reshape(1)
    pooler3 = pooler.reshape(B, 1, H)   # singleton mid dim -> any Bt is legal

    # ---- optional deeper pipelining of the q stream for long sequences
    q_tile_bytes = Bt * St * H * itemsize
    deep = (n_s > 2) and (3 * q_tile_bytes <= (vmem_budget * 3) // 5) \
        and hasattr(pl, "Buffered")
    try:
        if deep:
            q_spec = pl.BlockSpec((Bt, St, H), lambda b, s: (b, s, 0),
                                  pipeline_mode=pl.Buffered(3))
        else:
            q_spec = pl.BlockSpec((Bt, St, H), lambda b, s: (b, s, 0))
    except TypeError:
        deep = False
        q_spec = pl.BlockSpec((Bt, St, H), lambda b, s: (b, s, 0))

    n_q_buf = 3 if deep else 2
    vmem_est = (n_q_buf * q_tile_bytes            # q_embedding tiles
                + 2 * Bt * H * itemsize           # pooler tiles
                + 2 * 5 * H * 4                   # weight tiles
                + 3 * Bt * H * 4                  # f32 scratch accumulators
                + 2 * Bt * OUT_LANES * 4)         # output block
    vmem_limit = int(min(vmem_budget, max(2 * vmem_est, 16 * 1024 * 1024)))

    kernel = _make_head_kernel(S, St, n_s, masked)

    out = pl.pallas_call(
        kernel,
        out_shape=jax.ShapeDtypeStruct((B, 1, OUT_LANES), jnp.float32),
        grid_spec=pltpu.PrefetchScalarGridSpec(
            num_scalar_prefetch=0,
            grid=(n_b, n_s),                      # batch parallel, seq reduce
            in_specs=[
                q_spec,                                               # q_emb
                pl.BlockSpec((Bt, 1, H), lambda b, s: (b, 0, 0)),     # pooler
                pl.BlockSpec((5, H), lambda b, s: (0, 0)),            # fc w
                pl.BlockSpec(memory_space=pltpu.MemorySpace.SMEM),    # fc bias
            ],
            out_specs=pl.BlockSpec((Bt, 1, OUT_LANES),
                                   lambda b, s: (b, 0, 0)),
            scratch_shapes=[
                pltpu.VMEM((Bt, H), jnp.float32),   # running sum (f32)
                pltpu.VMEM((Bt, H), jnp.float32),   # running max (f32)
                pltpu.VMEM((Bt, H), jnp.float32),   # first-token rows (f32)
            ],
        ),
        compiler_params=pltpu.CompilerParams(
            dimension_semantics=("parallel", "arbitrary"),
            vmem_limit_bytes=vmem_limit,
        ),
        interpret=interpret,
    )(q_embedding, pooler3, w5, bias)

    return out[:, 0, 0:1]                          # [B, 1]


# ----------------------------------------------------------------------------
# Synthetic "PreModel" stub (plain JAX) and pure-JAX reference for the head
# ----------------------------------------------------------------------------
def pre_model_stub(q_id, q_mask, q_atn, params):
    """Deterministic stand-in for the pretrained BERT: returns
    (hidden_states [B,S,H], pooler_output [B,H])."""
    emb = params["tok_emb"][q_id] + params["type_emb"][q_atn]       # [B, S, H]
    emb = emb * q_mask[..., None].astype(emb.dtype)
    hidden = jnp.tanh(emb)                                          # [B, S, H]
    pooled = jnp.tanh(hidden[:, 0, :] @ params["pool_w"] + params["pool_b"])
    return hidden, pooled


def net_head_reference(q_embedding, pooler, fc_w, fc_b):
    qe = q_embedding.astype(jnp.float32)
    pooled = pooler.astype(jnp.float32)
    q = jnp.mean(qe, axis=1)                 # avg_pool over S
    a = jnp.max(qe, axis=1)                  # max_pool over S
    t = qe[:, -1, :]                         # last token
    e = qe[:, 0, :]                          # first token
    x = jnp.concatenate([q, a, t, e, pooled], axis=-1)   # [B, 5H]
    logit = x @ fc_w.astype(jnp.float32) + jnp.float32(fc_b)
    return jax.nn.sigmoid(logit)[:, None]    # [B, 1]


# ----------------------------------------------------------------------------
if __name__ == "__main__":
    key = jax.random.PRNGKey(0)
    B, S, H, V = 2, 8, 32, 64

    k1, k2, k3, k4, k5, k6 = jax.random.split(key, 6)
    q_id = jax.random.randint(k1, (B, S), 0, V)
    q_mask = jnp.ones((B, S), jnp.float32)
    q_atn = jax.random.randint(k2, (B, S), 0, 2)

    params = {
        "tok_emb": 0.1 * jax.random.normal(k3, (V, H), jnp.float32),
        "type_emb": 0.1 * jax.random.normal(k4, (2, H), jnp.float32),
        "pool_w": 0.1 * jax.random.normal(k5, (H, H), jnp.float32),
        "pool_b": jnp.zeros((H,), jnp.float32),
    }
    fc_w = 0.1 * jax.random.normal(k6, (5 * H,), jnp.float32)
    fc_b = jnp.float32(0.05)

    # "PreModel" (stub) -> fused Pallas head.
    q_embedding, pooled = pre_model_stub(q_id, q_mask, q_atn, params)
    # Perf: feed bf16 activations (halves the HBM read bytes of the
    # bandwidth-bound head); the kernel keeps f32 accumulation.
    q_embedding = q_embedding.astype(jnp.bfloat16)
    pooled = pooled.astype(jnp.bfloat16)

    out = net_head_pallas(q_embedding, pooled, fc_w, fc_b)
    out = jax.block_until_ready(out)

    # correctness check against the pure-JAX reference of the PyTorch head
    ref = net_head_reference(q_embedding, pooled, fc_w, fc_b)
    assert out.shape == (B, 1), out.shape
    np.testing.assert_allclose(np.asarray(out), np.asarray(ref),
                               rtol=1e-4, atol=1e-4)
    print("KERNEL_OK")
</pallas_src>

<mosaic_0001>
module attributes {stable_mosaic.version = 11 : i64} {
  func.func @kernel(%arg0: i32, %arg1: i32, %arg2: memref<1x8x32xbf16, #tpu.memory_space<vmem>>, %arg3: memref<1x1x32xbf16, #tpu.memory_space<vmem>>, %arg4: memref<5x32xf32, #tpu.memory_space<vmem>>, %arg5: memref<1xf32, #tpu.memory_space<smem>>, %arg6: memref<1x1x128xf32, #tpu.memory_space<vmem>>, %arg7: memref<1x32xf32, #tpu.memory_space<vmem>>, %arg8: memref<1x32xf32, #tpu.memory_space<vmem>>, %arg9: memref<1x32xf32, #tpu.memory_space<vmem>>) attributes {dimension_semantics = [#tpu.dimension_semantics<parallel>, #tpu.dimension_semantics<arbitrary>], iteration_bounds = array<i64: 2, 1>, scalar_prefetch = 0 : i64, scratch_operands = 3 : i64, tpu.core_type = #tpu.core_type<tc>, window_params = [{transform_indices = @transform_0, window_bounds = array<i64: 1, 8, 32>}, {transform_indices = @transform_1, window_bounds = array<i64: 1, 1, 32>}, {pipeline_mode = #tpu.pipeline_mode<synchronous>, transform_indices = @transform_2, window_bounds = array<i64: 5, 32>}, {transform_indices = @transform_3, window_bounds = array<i64: 1>}, {transform_indices = @transform_4, window_bounds = array<i64: 1, 1, 128>}]} {
    %c0 = arith.constant 0 : index
    %c0_0 = arith.constant 0 : index
    %c0_1 = arith.constant 0 : index
    %0 = vector.load %arg2[%c0, %c0_0, %c0_1] : memref<1x8x32xbf16, #tpu.memory_space<vmem>>, vector<1x8x32xbf16>
    %c0_i32 = arith.constant 0 : i32
    %1 = arith.cmpi eq, %arg1, %c0_i32 : i32
    %2 = arith.extui %1 : i1 to i32
    %c0_i32_2 = arith.constant 0 : i32
    %3 = arith.cmpi ne, %2, %c0_i32_2 : i32
    scf.if %3 {
      %cst_14 = arith.constant 0.000000e+00 : f32
      %17 = vector.broadcast %cst_14 : f32 to vector<1x32xf32>
      %c0_15 = arith.constant 0 : index
      %c0_16 = arith.constant 0 : index
      %18 = vector.load %arg7[%c0_15, %c0_16] : memref<1x32xf32, #tpu.memory_space<vmem>>, vector<1x32xf32>
      tpu.vector_store %arg7[%c0_15, %c0_16], %17 {strides = array<i32>} : memref<1x32xf32, #tpu.memory_space<vmem>>, vector<1x32xf32>,
      %cst_17 = arith.constant 0xFF800000 : f32
      %19 = vector.broadcast %cst_17 : f32 to vector<1x32xf32>
      %c0_18 = arith.constant 0 : index
      %c0_19 = arith.constant 0 : index
      %20 = vector.load %arg8[%c0_18, %c0_19] : memref<1x32xf32, #tpu.memory_space<vmem>>, vector<1x32xf32>
      tpu.vector_store %arg8[%c0_18, %c0_19], %19 {strides = array<i32>} : memref<1x32xf32, #tpu.memory_space<vmem>>, vector<1x32xf32>,
      %21 = vector.extract_strided_slice %0 {offsets = [0, 0, 0], sizes = [1, 1, 32], strides = [1, 1, 1]} : vector<1x8x32xbf16> to vector<1x1x32xbf16>
      %22 = vector.shape_cast %21 : vector<1x1x32xbf16> to vector<1x32xbf16>
      %23 = arith.extf %22 : vector<1x32xbf16> to vector<1x32xf32>
      %c0_20 = arith.constant 0 : index
      %c0_21 = arith.constant 0 : index
      %24 = vector.load %arg9[%c0_20, %c0_21] : memref<1x32xf32, #tpu.memory_space<vmem>>, vector<1x32xf32>
      tpu.vector_store %arg9[%c0_20, %c0_21], %23 {strides = array<i32>} : memref<1x32xf32, #tpu.memory_space<vmem>>, vector<1x32xf32>,
    } else {
    }
    %c0_3 = arith.constant 0 : index
    %c0_4 = arith.constant 0 : index
    %4 = vector.load %arg7[%c0_3, %c0_4] : memref<1x32xf32, #tpu.memory_space<vmem>>, vector<1x32xf32>
    %5 = arith.extf %0 : vector<1x8x32xbf16> to vector<1x8x32xf32>
    %cst = arith.constant dense<0.000000e+00> : vector<1x32xf32>
    %6 = vector.multi_reduction <add>, %5, %cst [1] : vector<1x8x32xf32> to vector<1x32xf32>
    %7 = arith.addf %4, %6 : vector<1x32xf32>
    %c0_5 = arith.constant 0 : index
    %c0_6 = arith.constant 0 : index
    %8 = vector.load %arg7[%c0_5, %c0_6] : memref<1x32xf32, #tpu.memory_space<vmem>>, vector<1x32xf32>
    tpu.vector_store %arg7[%c0_5, %c0_6], %7 {strides = array<i32>} : memref<1x32xf32, #tpu.memory_space<vmem>>, vector<1x32xf32>,
    %c0_7 = arith.constant 0 : index
    %c0_8 = arith.constant 0 : index
    %9 = vector.load %arg8[%c0_7, %c0_8] : memref<1x32xf32, #tpu.memory_space<vmem>>, vector<1x32xf32>
    %cst_9 = arith.constant dense<0xFF80> : vector<1x32xbf16>
    %10 = vector.multi_reduction <maximumf>, %0, %cst_9 [1] : vector<1x8x32xbf16> to vector<1x32xbf16>
    %11 = arith.extf %10 : vector<1x32xbf16> to vector<1x32xf32>
    %12 = arith.maximumf %9, %11 : vector<1x32xf32>
    %c0_10 = arith.constant 0 : index
    %c0_11 = arith.constant 0 : index
    %13 = vector.load %arg8[%c0_10, %c0_11] : memref<1x32xf32, #tpu.memory_space<vmem>>, vector<1x32xf32>
    tpu.vector_store %arg8[%c0_10, %c0_11], %12 {strides = array<i32>} : memref<1x32xf32, #tpu.memory_space<vmem>>, vector<1x32xf32>,
    %c0_i32_12 = arith.constant 0 : i32
    %14 = arith.cmpi eq, %arg1, %c0_i32_12 : i32
    %15 = arith.extui %14 : i1 to i32
    %c0_i32_13 = arith.constant 0 : i32
    %16 = arith.cmpi ne, %15, %c0_i32_13 : i32
    scf.if %16 {
      %17 = vector.extract_strided_slice %0 {offsets = [0, 7, 0], sizes = [1, 1, 32], strides = [1, 1, 1]} : vector<1x8x32xbf16> to vector<1x1x32xbf16>
      %18 = vector.shape_cast %17 : vector<1x1x32xbf16> to vector<1x32xbf16>
      %19 = arith.extf %18 : vector<1x32xbf16> to vector<1x32xf32>
      %c0_14 = arith.constant 0 : index
      %c0_15 = arith.constant 0 : index
      %20 = vector.load %arg7[%c0_14, %c0_15] : memref<1x32xf32, #tpu.memory_space<vmem>>, vector<1x32xf32>
      %cst_16 = arith.constant 1.250000e-01 : f32
      %21 = vector.broadcast %cst_16 : f32 to vector<1x32xf32>
      %22 = arith.mulf %20, %21 : vector<1x32xf32>
      %c0_17 = arith.constant 0 : index
      %c0_18 = arith.constant 0 : index
      %23 = vector.load %arg4[%c0_17, %c0_18] : memref<5x32xf32, #tpu.memory_space<vmem>>, vector<5x32xf32>
      %c0_19 = arith.constant 0 : index
      %c0_20 = arith.constant 0 : index
      %c0_21 = arith.constant 0 : index
      %24 = vector.load %arg3[%c0_19, %c0_20, %c0_21] : memref<1x1x32xbf16, #tpu.memory_space<vmem>>, vector<1x1x32xbf16>
      %25 = vector.shape_cast %24 : vector<1x1x32xbf16> to vector<1x32xbf16>
      %26 = arith.extf %25 : vector<1x32xbf16> to vector<1x32xf32>
      %27 = vector.extract_strided_slice %23 {offsets = [0, 0], sizes = [1, 32], strides = [1, 1]} : vector<5x32xf32> to vector<1x32xf32>
      %28 = arith.mulf %27, %22 : vector<1x32xf32>
      %29 = vector.extract_strided_slice %23 {offsets = [1, 0], sizes = [1, 32], strides = [1, 1]} : vector<5x32xf32> to vector<1x32xf32>
      %c0_22 = arith.constant 0 : index
      %c0_23 = arith.constant 0 : index
      %30 = vector.load %arg8[%c0_22, %c0_23] : memref<1x32xf32, #tpu.memory_space<vmem>>, vector<1x32xf32>
      %31 = arith.mulf %29, %30 : vector<1x32xf32>
      %32 = arith.addf %28, %31 : vector<1x32xf32>
      %33 = vector.extract_strided_slice %23 {offsets = [2, 0], sizes = [1, 32], strides = [1, 1]} : vector<5x32xf32> to vector<1x32xf32>
      %34 = arith.mulf %33, %19 : vector<1x32xf32>
      %35 = arith.addf %32, %34 : vector<1x32xf32>
      %36 = vector.extract_strided_slice %23 {offsets = [3, 0], sizes = [1, 32], strides = [1, 1]} : vector<5x32xf32> to vector<1x32xf32>
      %c0_24 = arith.constant 0 : index
      %c0_25 = arith.constant 0 : index
      %37 = vector.load %arg9[%c0_24, %c0_25] : memref<1x32xf32, #tpu.memory_space<vmem>>, vector<1x32xf32>
      %38 = arith.mulf %36, %37 : vector<1x32xf32>
      %39 = arith.addf %35, %38 : vector<1x32xf32>
      %40 = vector.extract_strided_slice %23 {offsets = [4, 0], sizes = [1, 32], strides = [1, 1]} : vector<5x32xf32> to vector<1x32xf32>
      %41 = arith.mulf %40, %26 : vector<1x32xf32>
      %42 = arith.addf %39, %41 : vector<1x32xf32>
      %cst_26 = arith.constant dense<0.000000e+00> : vector<1xf32>
      %43 = vector.multi_reduction <add>, %42, %cst_26 [1] : vector<1x32xf32> to vector<1xf32>
      %44 = vector.shape_cast %43 : vector<1xf32> to vector<1x1xf32>
      %c0_27 = arith.constant 0 : index
      %45 = memref.load %arg5[%c0_27] : memref<1xf32, #tpu.memory_space<smem>>
      %46 = vector.broadcast %45 : f32 to vector<1x1xf32>
      %47 = arith.addf %44, %46 : vector<1x1xf32>
      %48 = arith.negf %47 : vector<1x1xf32>
      %49 = math.exp %48 : vector<1x1xf32>
      %cst_28 = arith.constant 1.000000e+00 : f32
      %50 = vector.broadcast %cst_28 : f32 to vector<1x1xf32>
      %51 = arith.addf %50, %49 : vector<1x1xf32>
      %52 = arith.divf %50, %51 : vector<1x1xf32>
      %53 = vector.shape_cast %52 : vector<1x1xf32> to vector<1x1x1xf32>
      %54 = vector.shape_cast %53 : vector<1x1x1xf32> to vector<1x1x1xf32>
      %55 = vector.broadcast %54 : vector<1x1x1xf32> to vector<1x1x128xf32>
      %c0_29 = arith.constant 0 : index
      %c0_30 = arith.constant 0 : index
      %c0_31 = arith.constant 0 : index
      %56 = vector.load %arg6[%c0_29, %c0_30, %c0_31] : memref<1x1x128xf32, #tpu.memory_space<vmem>>, vector<1x1x128xf32>
      tpu.vector_store %arg6[%c0_29, %c0_30, %c0_31], %55 {strides = array<i32>} : memref<1x1x128xf32, #tpu.memory_space<vmem>>, vector<1x1x128xf32>,
    } else {
    }
    return
  }
  func.func @transform_0(%arg0: i32, %arg1: i32) -> (i32, i32, i32) {
    %c0_i32 = arith.constant 0 : i32
    %c0_i32_0 = arith.constant 0 : i32
    return %arg0, %arg1, %c0_i32 : i32, i32, i32
  }
  func.func @transform_1(%arg0: i32, %arg1: i32) -> (i32, i32, i32) {
    %c0_i32 = arith.constant 0 : i32
    %c0_i32_0 = arith.constant 0 : i32
    %c0_i32_1 = arith.constant 0 : i32
    return %arg0, %c0_i32, %c0_i32_0 : i32, i32, i32
  }
  func.func @transform_2(%arg0: i32, %arg1: i32) -> (i32, i32) {
    %c0_i32 = arith.constant 0 : i32
    %c0_i32_0 = arith.constant 0 : i32
    %c0_i32_1 = arith.constant 0 : i32
    return %c0_i32, %c0_i32_0 : i32, i32
  }
  func.func @transform_3(%arg0: i32, %arg1: i32) -> i32 {
    %c0_i32 = arith.constant 0 : i32
    %c0_i32_0 = arith.constant 0 : i32
    return %c0_i32 : i32
  }
  func.func @transform_4(%arg0: i32, %arg1: i32) -> (i32, i32, i32) {
    %c0_i32 = arith.constant 0 : i32
    %c0_i32_0 = arith.constant 0 : i32
    %c0_i32_1 = arith.constant 0 : i32
    return %arg0, %c0_i32, %c0_i32_0 : i32, i32, i32
  }
}

</mosaic_0001>

<llo_original>
// kernel: tpu_custom_call.1
$region0: #{tpu_custom_call.1}
  #allocation0 [shape = 'u32[]', space=smem, size = 0x4, offset = 0x4, fixed_abs, tag = 'smem constant byte address 0x4 - core index']
  #allocation1 [shape = 'u32[144,128]{1,0:T(1,128)}', space=vmem, size = 0x12000, scoped, tag = 'internal scratch']
  #allocation2 [shape = 'f32[1,32]{1,0:T(1,128)}', space=vmem, size = 0x200, scoped, tag = 'scratch operand']
  #allocation3 [shape = 'f32[1,32]{1,0:T(1,128)}', space=vmem, size = 0x200, scoped, tag = 'scratch operand']
  #allocation4 [shape = 'f32[1,32]{1,0:T(1,128)}', space=vmem, size = 0x200, scoped, tag = 'scratch operand']
  #allocation5 [shape = 'f32[1]{0:T(128)S(6)}', space=smem, size = 0x200, scoped, tag = 'scoped memory for tpu_custom_call.1']
  %s0 = inlined_call_operand.hbm [shape: bf16[2,8,32], index: 0, kind: input, shape index: {}]
  %s1 = inlined_call_operand.vmem [shape: bf16[2,1,32], index: 1, kind: input, shape index: {}]
  %s2 = inlined_call_operand.vmem [shape: f32[5,32], index: 2, kind: input, shape index: {}]
  %s3 = inlined_call_operand.<no memory space> [shape: f32[1], index: 3, kind: input, shape index: {}]
  %s4 = inlined_call_operand.hbm [shape: f32[2,1,128], index: 4, kind: output, shape index: {}]
  %s5 = sld [smem:[#allocation0]]
  $region61: #{tpu_custom_call.1} parent=0
    _
  %s7 = ssub.s32 1, %s5
  %s8 = scalar_select 0, %s7, %s5
  %9 = sst [smem:[#allocation5]] %s3
  $region1: #{tpu_custom_call.1} parent=0
    #allocation6 [shape = 'u8[4096]{0}', space=vmem, size = 0x1000, scoped, tag = 'input window, operand 0']
    #allocation7 [shape = 's32[2]{0}', space=sflag, size = 0x8, scoped, tag = 'scoped memory for tpu_custom_call.1']
    #allocation8 [shape = 's32[2]{0}', space=sflag, size = 0x8, scoped, tag = 'scoped memory for tpu_custom_call.1']
    #allocation9 [shape = 'u8[1024]{0}', space=vmem, size = 0x400, scoped, tag = 'output window, operand 0']
    %10 = vsyncpa [#allocation7], 0
    %s11 = scalar_lea.sflag [#allocation7], 1
    %12 = vsyncpa %s11, 0
    %13 = vsyncpa [#allocation8], 0
    %s14 = scalar_lea.sflag [#allocation8], 1
    %15 = vsyncpa %s14, 0
    loop: start=0, step=1, limit=4
    $region2: #{tpu_custom_call.1} parent=1 // loop_pre_header
      _
    $region3: #{tpu_custom_call.1} parent=1 // loop_header
      %s17 = sphi 0, %s21
      %p18 = scmp.ge.s32.totalorder %s17, 4
      %s24 = sphi 0, %s36
      %s25 = sphi 0, %s32
      %s26 = sphi 0, %s24
      %s27 = sphi 0, %s25
      %s28 = sphi 0, %s26
      %s29 = sphi 0, %s27
      %s41 = sphi 0, %s43
      %s44 = sphi 0, %s41
      %s45 = sphi 0, %s44
      %s61 = sphi 0, %s45
      %s67 = sphi 0, %s69
      %s70 = sphi 0, %s67
      %s71 = sphi 0, %s70
      %s87 = sphi 0, %s71
      %s91 = sphi 0, %s91
      %s93 = sphi 0, %s91
      %s94 = sphi 0, %s93
      %s108 = sphi 0, %s94
      %s112 = sphi 0, %s112
      %s114 = sphi 0, %s112
      %s115 = sphi 0, %s114
      %s129 = sphi 0, %s115
      %s135 = sphi 0, %s137
      %s138 = sphi 0, %s135
      %s139 = sphi 0, %s138
      %s155 = sphi 0, %s139
    $region4: #{tpu_custom_call.1} parent=1 // loop_header_branch
      %20 = sbr.rel (%p18) target = $region8
    $region5: #{tpu_custom_call.1} parent=1 // loop_body
      %s22 = ssub.s32 %s17, 1
      %s23 = ssub.s32 %s17, 2
      %s30 = sadd.s32 1, %s25
      %p31 = scmp.ge.s32.totalorder %s30, 1
      %s32 = scalar_select %p31, 0, %s30
      %s33 = sadd.s32 1, %s24
      %s34 = scalar_select %p31, %s33, %s24
      %p35 = scmp.ge.s32.totalorder %s34, 2
      %s36 = scalar_select %p35, 0, %s34
      %s37 = ssub.s32 %s24, %s36
      %s38 = ssub.s32 %s25, %s32
      %s39 = sor.u32 %s37, %s38
      %p40 = scmp.eq.s32.totalorder %s39, 0
      %s42 = sadd.s32 %s41, 1
      %s43 = scalar_select %p40, %s41, %s42
      %p46 = pneg %p40
      %p47 = scmp.eq.s32.totalorder %s17, 1
      %p48 = por %p46, %p47
      %p49 = scmp.ne.s32.totalorder %s41, %s44
      %p50 = scmp.eq.s32.totalorder %s17, 0
      %p51 = por %p49, %p50
      %p52 = scmp.ne.s32.totalorder %s41, %s44
      %p53 = scmp.eq.s32.totalorder %s22, 1
      %p54 = por %p52, %p53
      %p55 = scmp.ne.s32.totalorder %s44, %s45
      %p56 = scmp.eq.s32.totalorder %s22, 0
      %p57 = por %p55, %p56
      %p58 = scmp.ne.s32.totalorder %s44, %s45
      %p59 = scmp.eq.s32.totalorder %s23, 1
      %p60 = por %p58, %p59
      %p62 = scmp.ne.s32.totalorder %s45, %s61
      %p63 = scmp.eq.s32.totalorder %s23, 0
      %p64 = por %p62, %p63
      %s65 = ssub.s32 %s24, %s36
      %p66 = scmp.eq.s32.totalorder %s65, 0
      %s68 = sadd.s32 %s67, 1
      %s69 = scalar_select %p66, %s67, %s68
      %p72 = pneg %p66
      %p73 = scmp.eq.s32.totalorder %s17, 1
      %p74 = por %p72, %p73
      %p75 = scmp.ne.s32.totalorder %s67, %s70
      %p76 = scmp.eq.s32.totalorder %s17, 0
      %p77 = por %p75, %p76
      %p78 = scmp.ne.s32.totalorder %s67, %s70
      %p79 = scmp.eq.s32.totalorder %s22, 1
      %p80 = por %p78, %p79
      %p81 = scmp.ne.s32.totalorder %s70, %s71
      %p82 = scmp.eq.s32.totalorder %s22, 0
      %p83 = por %p81, %p82
      %p84 = scmp.ne.s32.totalorder %s70, %s71
      %p85 = scmp.eq.s32.totalorder %s23, 1
      %p86 = por %p84, %p85
      %p88 = scmp.ne.s32.totalorder %s71, %s87
      %p89 = scmp.eq.s32.totalorder %s23, 0
      %p90 = por %p88, %p89
      %s92 = sadd.s32 %s91, 1
      %p95 = scmp.eq.s32.totalorder %s17, 1
      %p96 = scmp.ne.s32.totalorder %s91, %s93
      %p97 = scmp.eq.s32.totalorder %s17, 0
      %p98 = por %p96, %p97
      %p99 = scmp.ne.s32.totalorder %s91, %s93
      %p100 = scmp.eq.s32.totalorder %s22, 1
      %p101 = por %p99, %p100
      %p102 = scmp.ne.s32.totalorder %s93, %s94
      %p103 = scmp.eq.s32.totalorder %s22, 0
      %p104 = por %p102, %p103
      %p105 = scmp.ne.s32.totalorder %s93, %s94
      %p106 = scmp.eq.s32.totalorder %s23, 1
      %p107 = por %p105, %p106
      %p109 = scmp.ne.s32.totalorder %s94, %s108
      %p110 = scmp.eq.s32.totalorder %s23, 0
      %p111 = por %p109, %p110
      %s113 = sadd.s32 %s112, 1
      %p116 = scmp.eq.s32.totalorder %s17, 1
      %p117 = scmp.ne.s32.totalorder %s112, %s114
      %p118 = scmp.eq.s32.totalorder %s17, 0
      %p119 = por %p117, %p118
      %p120 = scmp.ne.s32.totalorder %s112, %s114
      %p121 = scmp.eq.s32.totalorder %s22, 1
      %p122 = por %p120, %p121
      %p123 = scmp.ne.s32.totalorder %s114, %s115
      %p124 = scmp.eq.s32.totalorder %s22, 0
      %p125 = por %p123, %p124
      %p126 = scmp.ne.s32.totalorder %s114, %s115
      %p127 = scmp.eq.s32.totalorder %s23, 1
      %p128 = por %p126, %p127
      %p130 = scmp.ne.s32.totalorder %s115, %s129
      %p131 = scmp.eq.s32.totalorder %s23, 0
      %p132 = por %p130, %p131
      %s133 = ssub.s32 %s24, %s36
      %p134 = scmp.eq.s32.totalorder %s133, 0
      %s136 = sadd.s32 %s135, 1
      %s137 = scalar_select %p134, %s135, %s136
      %p140 = pneg %p134
      %p141 = scmp.eq.s32.totalorder %s17, 1
      %p142 = por %p140, %p141
      %p143 = scmp.ne.s32.totalorder %s135, %s138
      %p144 = scmp.eq.s32.totalorder %s17, 0
      %p145 = por %p143, %p144
      %p146 = scmp.ne.s32.totalorder %s135, %s138
      %p147 = scmp.eq.s32.totalorder %s22, 1
      %p148 = por %p146, %p147
      %p149 = scmp.ne.s32.totalorder %s138, %s139
      %p150 = scmp.eq.s32.totalorder %s22, 0
      %p151 = por %p149, %p150
      %p152 = scmp.ne.s32.totalorder %s138, %s139
      %p153 = scmp.eq.s32.totalorder %s23, 1
      %p154 = por %p152, %p153
      %p156 = scmp.ne.s32.totalorder %s139, %s155
      %p157 = scmp.eq.s32.totalorder %s23, 0
      %p158 = por %p156, %p157
      %p159 = scmp.le.s32.totalorder 1, %s17
      %p160 = scmp.lt.s32.totalorder %s17, 3
      %p161 = pnand %p159, %p160
      %p162 = pneg %p161
      // Predicated region
      $region9: #{tpu_custom_call.1} parent=5 // pred_check
        _
      $region10: #{tpu_custom_call.1} parent=5 // pred_check_branch
        %164 = sbr.rel (%p161) target = $region12
      $region11: #{tpu_custom_call.1} parent=5 // pred_region
        %s165 = ssub.s32 %s17, 1
        // Predicated region
        $region13: #{tpu_custom_call.1} parent=11 // pred_check
          %p166 = pneg %p104
        $region14: #{tpu_custom_call.1} parent=11 // pred_check_branch
          %168 = sbr.rel (%p166) target = $region16
        $region15: #{tpu_custom_call.1} parent=11 // pred_region
          _
        $region16: #{tpu_custom_call.1} parent=11 // pred_fallthru
          _
        // Predicated region
        $region17: #{tpu_custom_call.1} parent=11 // pred_check
          %p169 = pneg %p125
        $region18: #{tpu_custom_call.1} parent=11 // pred_check_branch
          %171 = sbr.rel (%p169) target = $region20
        $region19: #{tpu_custom_call.1} parent=11 // pred_region
          _
        $region20: #{tpu_custom_call.1} parent=11 // pred_fallthru
          _
      $region12: #{tpu_custom_call.1} parent=5 // pred_fallthru
        _
      %p172 = scmp.lt.s32.totalorder %s17, 2
      // Predicated region
      $region21: #{tpu_custom_call.1} parent=5 // pred_check
        %p173 = pneg %p172
      $region22: #{tpu_custom_call.1} parent=5 // pred_check_branch
        %175 = sbr.rel (%p173) target = $region24
      $region23: #{tpu_custom_call.1} parent=5 // pred_region
        // Predicated region
        $region25: #{tpu_custom_call.1} parent=23 // pred_check
          %p176 = pneg %p51
        $region26: #{tpu_custom_call.1} parent=23 // pred_check_branch
          %178 = sbr.rel (%p176) target = $region28
        $region27: #{tpu_custom_call.1} parent=23 // pred_region
          %s179 = sand.u32 %s41, 1
          %s180 = scalar_lea.sflag [#allocation7], %s179
          %s181 = sand.u32 %s41, 1
          %s182 = smul.addr %s181, 4
          %s183 = scalar_lea.vmem [#allocation6], %s182
          %s185 = ssub.s32 64, 64
          %186 = vsyncadd %s180, %s185
          %s187 = sadd.s32 %s25, %s24
          %s188 = smul.addr %s187, 64
          %s189 = scalar_lea.hbm %s0, %s188
          %s191 = sshll.u32 %s183, 4
          %s192 = int_to_ptr.vmem [resolvable:$true] %s191
          %194 = dma.hbm_to_vmem [thread:$0]  %s189, 64, %s192, %s180
        $region28: #{tpu_custom_call.1} parent=23 // pred_fallthru
          _
        // Predicated region
        $region29: #{tpu_custom_call.1} parent=23 // pred_check
          %p195 = pneg %p77
        $region30: #{tpu_custom_call.1} parent=23 // pred_check_branch
          %197 = sbr.rel (%p195) target = $region32
        $region31: #{tpu_custom_call.1} parent=23 // pred_region
          %p198 = scmp.lt.s32.totalorder %s24, 1
          %s199 = scalar_select %p198, %s24, 1
          %s200 = scalar_lea.vmem %s1, %s199
        $region32: #{tpu_custom_call.1} parent=23 // pred_fallthru
          _
      $region24: #{tpu_custom_call.1} parent=5 // pred_fallthru
        _
      %p201 = scmp.le.s32.totalorder 1, %s17
      %p202 = scmp.lt.s32.totalorder %s17, 3
      %p203 = pnand %p201, %p202
      %p204 = pneg %p203
      // Predicated region
      $region33: #{tpu_custom_call.1} parent=5 // pred_check
        _
      $region34: #{tpu_custom_call.1} parent=5 // pred_check_branch
        %206 = sbr.rel (%p203) target = $region36
      $region35: #{tpu_custom_call.1} parent=5 // pred_region
        %s207 = ssub.s32 %s17, 1
        %s208 = sand.u32 %s44, 1
        %s209 = scalar_lea.sflag [#allocation7], %s208
        %s210 = sand.u32 %s44, 1
        %s211 = smul.addr %s210, 4
        %s212 = scalar_lea.vmem [#allocation6], %s211
        // Predicated region
        $region37: #{tpu_custom_call.1} parent=35 // pred_check
          %p213 = pneg %p57
        $region38: #{tpu_custom_call.1} parent=35 // pred_check_branch
          %215 = sbr.rel (%p213) target = $region40
        $region39: #{tpu_custom_call.1} parent=35 // pred_region
          %216 = dma.done %s209, 64
        $region40: #{tpu_custom_call.1} parent=35 // pred_fallthru
          _
        %s217 = sand.u32 %s44, 1
        %s218 = scalar_lea.sflag [#allocation7], %s217
        %s219 = sand.u32 %s44, 1
        %s220 = smul.addr %s219, 4
        %s221 = scalar_lea.vmem [#allocation6], %s220
        %p222 = pneg %p57
        %p223 = pneg %p54
        %p224 = scmp.lt.s32.totalorder %s26, 1
        %s225 = scalar_select %p224, %s26, 1
        %s226 = scalar_lea.vmem %s1, %s225
        %p227 = pneg %p83
        %p228 = pneg %p80
        %p229 = pneg %p104
        %p230 = pneg %p101
        %p231 = pneg %p125
        %p232 = pneg %p122
        %p233 = pneg %p151
        %p234 = pneg %p148
        %s235 = sand.u32 %s138, 1
        %s236 = scalar_lea.sflag [#allocation8], %s235
        %s237 = sand.u32 %s138, 1
        %s238 = scalar_lea.vmem [#allocation9], %s237
        %p239 = scmp.lt.s32.totalorder %s26, 1
        %s240 = scalar_select %p239, %s26, 1
        %s241 = scalar_lea.vmem %s1, %s240
        %v243 = vld [vmem:[%s212] sm:$0xf]
        %p244 = scmp.eq.s32.totalorder %s27, 0
        // Predicated region
        $region41: #{tpu_custom_call.1} parent=35 // pred_check
          %p245 = pneg %p244
        $region42: #{tpu_custom_call.1} parent=35 // pred_check_branch
          %247 = sbr.rel (%p245) target = $region44
        $region43: #{tpu_custom_call.1} parent=35 // pred_region
          %vm248 = vcmask 253952
          %249 = vst.msk [vmem:[#allocation2] sm:$0x1] %vm248, 0.0
          %250 = vst.msk [vmem:[#allocation3] sm:$0x1] %vm248, -inf
          %v251 = vunpack.c.l.bf16 %v243
          %252 = vst.msk [vmem:[#allocation4] sm:$0x1] %vm248, %v251
        $region44: #{tpu_custom_call.1} parent=35 // pred_fallthru
          _
        %v253 = vld [vmem:[#allocation2] sm:$0x1]
        %v254 = vunpack.c.l.bf16 %v243
        %vm255 = vcmask 261120
        %v256 = vsel %vm255, %v254, 0.0
        %v257 = vrot.slane %v256, 4
        %v258 = vadd.f32 %v256, %v257
        %v259 = vrot.slane %v258, 2
        %v260 = vadd.f32 %v258, %v259
        %v261 = vrot.slane %v260, 1
        %v262 = vadd.f32 %v260, %v261
        %v263 = vadd.f32 %v253, %v262
        %vm264 = vcmask 253952
        %265 = vst.msk [vmem:[#allocation2] sm:$0x1] %vm264, %v263
        %v266 = vld [vmem:[#allocation3] sm:$0x1]
        %vm267 = vcmask 257024
        %v270 = vsel %vm267, %v243, 4286644096
        %v272 = vunpack.i.l.bf16 %v270
        %v273 = vunpack.i.h.bf16 %v270
        %v274 = vmax.f32 %v272, %v273
        %v275 = vrot.slane %v274, 4
        %v276 = vmax.f32 %v274, %v275
        %v277 = vrot.slane %v276, 2
        %v278 = vmax.f32 %v276, %v277
        %v279 = vrot.slane %v278, 1
        %v280 = vmax.f32 %v278, %v279
        %v281 = vpack.i.bf16 %v280, %v280
        %v282 = vunpack.c.l.bf16 %v281
        %v283 = vmax.f32 %v266, %v282
        %284 = vst.msk [vmem:[#allocation3] sm:$0x1] %vm264, %v283
        // Predicated region
        $region45: #{tpu_custom_call.1} parent=35 // pred_check
          %p285 = pneg %p244
        $region46: #{tpu_custom_call.1} parent=35 // pred_check_branch
          %287 = sbr.rel (%p285) target = $region48
        $region47: #{tpu_custom_call.1} parent=35 // pred_region
          %v288 = vld [vmem:[#allocation2] sm:$0x1]
          %v289 = vmul.f32 %v288, 0.125
          %v290 = vld [vmem:[%s2] sm:$0x1f]
          %v291 = vld [vmem:[%s241] sm:$0x1]
          %v292 = vunpack.c.l.bf16 %v291
          %v293 = vmul.f32 %v290, %v289
          %v294 = vld [vmem:[#allocation3] sm:$0x1]
          %v296 = vlaneseq
          %v297 = vshrl.u32 %v296, 7
          %v298 = vsub.s32 0, %v297
          %v299 = vrot.slane %v294, %v298
          %v301 = vmul.f32 %v290, %v299
          %v303 = vrot.slane %v301, 1
          %v305 = vadd.f32 %v293, %v303
          %v307 = vrot.slane %v254, 5
          %v309 = vmul.f32 %v290, %v307
          %v311 = vrot.slane %v309, 2
          %v313 = vadd.f32 %v305, %v311
          %v314 = vld [vmem:[#allocation4] sm:$0x1]
          %v316 = vlaneseq
          %v317 = vshrl.u32 %v316, 7
          %v318 = vsub.s32 0, %v317
          %v319 = vrot.slane %v314, %v318
          %v321 = vmul.f32 %v290, %v319
          %v323 = vrot.slane %v321, 3
          %v325 = vadd.f32 %v313, %v323
          %v327 = vlaneseq
          %v328 = vshrl.u32 %v327, 7
          %v329 = vsub.s32 0, %v328
          %v330 = vrot.slane %v292, %v329
          %v332 = vmul.f32 %v290, %v330
          %v334 = vrot.slane %v332, 4
          %v336 = vadd.f32 %v325, %v334
          %v337 = vsel %vm264, %v336, 0.0
          %338 = vadd.xlane.f32.xlu0 %v337
          %v339 = vpop.xlane.xlu0 %338
          %s340 = sld [smem:[#allocation5]]
          %v341 = vstv %s340
          %v342 = vadd.f32 %v339, %v341
          %v343 = vxor.u32 %v342, 2147483648
          %v344 = vmul.f32 %v343, 1.442695
          %v345 = vpow.pop %v344
          %v346 = vadd.f32 %v345, 1.0
          %v347 = vrcp.pop %v346
          %v348 = vmul.f32 1.0, %v347
          %349 = vst [vmem:[%s238] sm:$0x1] %v348
        $region48: #{tpu_custom_call.1} parent=35 // pred_fallthru
          _
        %s350 = sand.u32 %s138, 1
        %s351 = scalar_lea.sflag [#allocation8], %s350
        %s352 = sand.u32 %s138, 1
        %s353 = scalar_lea.vmem [#allocation9], %s352
        // Predicated region
        $region49: #{tpu_custom_call.1} parent=35 // pred_check
          %p354 = pneg %p148
        $region50: #{tpu_custom_call.1} parent=35 // pred_check_branch
          %356 = sbr.rel (%p354) target = $region52
        $region51: #{tpu_custom_call.1} parent=35 // pred_region
          %s358 = ssub.s32 16, 16
          %359 = vsyncadd %s351, %s358
          %s360 = smul.addr %s26, 16
          %s361 = scalar_lea.hbm %s4, %s360
          %s363 = sshll.u32 %s353, 4
          %s364 = int_to_ptr.vmem [resolvable:$true] %s363
          %366 = dma.vmem_to_hbm [thread:$0]  %s364, 16, %s361, %s351
        $region52: #{tpu_custom_call.1} parent=35 // pred_fallthru
          _
      $region36: #{tpu_custom_call.1} parent=5 // pred_fallthru
        _
      %p367 = scmp.le.s32.totalorder 2, %s17
      // Predicated region
      $region53: #{tpu_custom_call.1} parent=5 // pred_check
        %p368 = pneg %p367
      $region54: #{tpu_custom_call.1} parent=5 // pred_check_branch
        %370 = sbr.rel (%p368) target = $region56
      $region55: #{tpu_custom_call.1} parent=5 // pred_region
        %s371 = ssub.s32 %s17, 2
        // Predicated region
        $region57: #{tpu_custom_call.1} parent=55 // pred_check
          %p372 = pneg %p154
        $region58: #{tpu_custom_call.1} parent=55 // pred_check_branch
          %374 = sbr.rel (%p372) target = $region60
        $region59: #{tpu_custom_call.1} parent=55 // pred_region
          %s375 = sand.u32 %s139, 1
          %s376 = scalar_lea.sflag [#allocation8], %s375
          %s377 = sand.u32 %s139, 1
          %s378 = scalar_lea.vmem [#allocation9], %s377
          %379 = dma.done %s376, 16
        $region60: #{tpu_custom_call.1} parent=55 // pred_fallthru
          _
      $region56: #{tpu_custom_call.1} parent=5 // pred_fallthru
        _
    $region6: #{tpu_custom_call.1} parent=1 // loop_footer
      %s21 = sadd.s32 1, %s17
    $region7: #{tpu_custom_call.1} parent=1 // loop_footer_branch
      %16 = sbr.rel target = $region3
    $region8: #{tpu_custom_call.1} parent=1 // loop_exit
      _
    %380 = vsyncpa [#allocation7], 1
    %s381 = scalar_lea.sflag [#allocation7], 1
    %382 = vsyncpa %s381, 1
    %383 = vsyncpa [#allocation8], 1
    %s384 = scalar_lea.sflag [#allocation8], 1
    %385 = vsyncpa %s384, 1

</llo_original>
